<compile_context>
chip_gen: v7x
topology: tpu7x:2x2x1
jax: 0.10.0
libtpu: 0.0.40
codegen_flags: <defaults>
</compile_context>

<pallas_src>
import functools

import jax
import jax.numpy as jnp
from jax import lax
from jax.experimental import pallas as pl
from jax.experimental.pallas import tpu as pltpu


def _make_sgns_kernel(B, L, N, radius):
    inv_pos = float(1.0 / (B * L * L))
    inv_neg = float(1.0 / (B * L * N))

    def kernel(c_ref, ctx_ref, out_ref):
        c = c_ref[...]      # (B, L, E)      center embeddings
        ctx = ctx_ref[...]  # (B, L+N, E)    [positive | negative] context embeddings

        # sims[b, i, j] = sum_e c[b, i, e] * ctx[b, j, e]
        # == torch.bmm(center, ctx.permute(0, 2, 1)); contraction on E keeps both
        # operands lane-dense on E and avoids an explicit in-kernel transpose.
        sims = lax.dot_general(
            c, ctx,
            dimension_numbers=(((2,), (2,)), ((0,), (0,))),
            preferred_element_type=jnp.float32,
        )  # (B, L, L+N)

        # Build band mask / sign / per-element weights in-kernel (no mask DMA).
        row = lax.broadcasted_iota(jnp.int32, (L, L + N), 0)
        col = lax.broadcasted_iota(jnp.int32, (L, L + N), 1)
        is_pos = col < L                                  # first L columns: positive part
        diff = jnp.abs(row - col)
        band = (diff <= radius) & (diff > 0)              # make_diag_mask(L, radius)

        weight = jnp.where(
            is_pos,
            jnp.where(band, jnp.float32(inv_pos), jnp.float32(0.0)),
            jnp.float32(inv_neg),
        )                                                 # (L, L+N)
        sign = jnp.where(is_pos, jnp.float32(-1.0), jnp.float32(1.0))

        # Positive columns (mask==1): BCE(sigmoid(x)*1, 1) = -log(sigmoid(x))
        #   = softplus(-x), with PyTorch's log clamp at -100  -> min(softplus(-x), 100)
        # Positive columns (mask==0): contribution is exactly 0 (weight==0).
        # Negative columns: BCE_with_logits(x, 0) = softplus(x) (no clamp).
        el = jnp.logaddexp(jnp.float32(0.0), sign[None, :, :] * sims)   # (B, L, L+N)
        el = jnp.where(is_pos[None, :, :], jnp.minimum(el, jnp.float32(100.0)), el)

        contrib = el * weight[None, :, :]                 # (B, L, L+N)
        # Single reduction at the end: sum over batch, then full 2-D reduce.
        out_ref[...] = jnp.sum(jnp.sum(contrib, axis=0), keepdims=True)

    return kernel


@functools.partial(jax.jit, static_argnames=("radius",))
def sgns_forward(center_embs, pos_ctx_embs, neg_ctx_embs, radius):
    B, L, E = center_embs.shape
    N = neg_ctx_embs.shape[1]

    # Fuse the two bmm's: one contraction against the concatenated context block.
    ctx = jnp.concatenate([pos_ctx_embs, neg_ctx_embs], axis=1)   # (B, L+N, E)

    kernel = _make_sgns_kernel(B, L, N, radius)
    out = pl.pallas_call(
        kernel,
        out_shape=jax.ShapeDtypeStruct((1, 1), jnp.float32),
        grid_spec=pltpu.PrefetchScalarGridSpec(
            num_scalar_prefetch=0,
            grid=(1,),
            in_specs=[
                pl.BlockSpec((B, L, E), lambda i: (0, 0, 0)),       # center embeddings
                pl.BlockSpec((B, L + N, E), lambda i: (0, 0, 0)),   # fused context embeddings
            ],
            out_specs=pl.BlockSpec((1, 1), lambda i: (0, 0)),
        ),
        compiler_params=pltpu.CompilerParams(
            dimension_semantics=("arbitrary",),
        ),
    )(center_embs, ctx)
    return out[0, 0]


def _reference_loss(center_embs, pos_ctx_embs, neg_ctx_embs, mask):
    """Pure-JAX reference matching the PyTorch forward semantics."""
    ps = jnp.einsum("ble,bke->blk", center_embs, pos_ctx_embs)
    pp = jax.nn.sigmoid(ps) * mask
    t = jnp.broadcast_to(mask, ps.shape)
    log_p = jnp.maximum(jnp.log(jnp.maximum(pp, 1e-38)), -100.0)
    log_1mp = jnp.maximum(jnp.log(jnp.maximum(1.0 - pp, 1e-38)), -100.0)
    pos = jnp.mean(-(t * log_p + (1.0 - t) * log_1mp))
    ns = jnp.einsum("ble,bne->bln", center_embs, neg_ctx_embs)
    neg = jnp.mean(jax.nn.softplus(ns))
    return pos + neg


if __name__ == "__main__":
    vocab_size, emb_size, sentence_len = 50, 32, 8
    radius, negative_samples_n, batch = 5, 5, 2

    key = jax.random.PRNGKey(0)
    k_cw, k_xw, k_sent, k_neg = jax.random.split(key, 4)

    # Deterministic parameter init (nn.Embedding uniform(-1/E, 1/E), row 0 = padding = 0)
    center_w = jax.random.uniform(
        k_cw, (vocab_size, emb_size), jnp.float32, -1.0 / emb_size, 1.0 / emb_size
    ).at[0].set(0.0)
    context_w = jax.random.uniform(
        k_xw, (vocab_size, emb_size), jnp.float32, -1.0 / emb_size, 1.0 / emb_size
    ).at[0].set(0.0)

    # make_diag_mask(sentence_len, radius) — only needed for the pure-JAX reference;
    # the kernel regenerates it internally with broadcasted_iota.
    idxs = jnp.arange(sentence_len)
    abs_diff = jnp.abs(idxs[None, :] - idxs[:, None])
    mask = ((abs_diff <= radius) & (abs_diff > 0)).astype(jnp.float32)

    # Inputs
    sentences = jax.random.randint(k_sent, (batch, sentence_len), 0, vocab_size)
    # torch.randint(1, vocab_size, ...) sampled deterministically with JAX PRNG instead
    negative_words = jax.random.randint(
        k_neg, (batch, negative_samples_n), 1, vocab_size
    )

    # Glue: embedding gathers (padding_idx=0 rows are zero by construction)
    center_embs = center_w[sentences]          # (B, L, E)
    pos_ctx_embs = context_w[sentences]        # (B, L, E)
    neg_ctx_embs = context_w[negative_words]   # (B, N, E)

    loss = sgns_forward(center_embs, pos_ctx_embs, neg_ctx_embs, radius)
    loss = jax.block_until_ready(loss)

    ref = _reference_loss(center_embs, pos_ctx_embs, neg_ctx_embs, mask)
    assert jnp.allclose(loss, ref, rtol=1e-5, atol=1e-5), (loss, ref)
    print("KERNEL_OK")
</pallas_src>

<mosaic_0001>
module attributes {stable_mosaic.version = 11 : i64} {
  func.func @kernel(%arg0: i32, %arg1: memref<2x8x32xf32, #tpu.memory_space<vmem>>, %arg2: memref<2x13x32xf32, #tpu.memory_space<vmem>>, %arg3: memref<1x1xf32, #tpu.memory_space<vmem>>) attributes {dimension_semantics = [#tpu.dimension_semantics<arbitrary>], iteration_bounds = array<i64: 1>, scalar_prefetch = 0 : i64, scratch_operands = 0 : i64, tpu.core_type = #tpu.core_type<tc>, window_params = [{pipeline_mode = #tpu.pipeline_mode<synchronous>, transform_indices = @transform_0, window_bounds = array<i64: 2, 8, 32>}, {pipeline_mode = #tpu.pipeline_mode<synchronous>, transform_indices = @transform_1, window_bounds = array<i64: 2, 13, 32>}, {pipeline_mode = #tpu.pipeline_mode<synchronous>, transform_indices = @transform_2, window_bounds = array<i64: 1, 1>}]} {
    %c0 = arith.constant 0 : index
    %c0_0 = arith.constant 0 : index
    %c0_1 = arith.constant 0 : index
    %0 = vector.load %arg1[%c0, %c0_0, %c0_1] : memref<2x8x32xf32, #tpu.memory_space<vmem>>, vector<2x8x32xf32>
    %c0_2 = arith.constant 0 : index
    %c0_3 = arith.constant 0 : index
    %c0_4 = arith.constant 0 : index
    %1 = vector.load %arg2[%c0_2, %c0_3, %c0_4] : memref<2x13x32xf32, #tpu.memory_space<vmem>>, vector<2x13x32xf32>
    %cst = arith.constant dense<0.000000e+00> : vector<2x8x13xf32>
    %2 = tpu.matmul %0, %1, %cst {dimension_numbers = #tpu.dot_dimension_numbers<[2], [2], [1], [1], [0, 0, 0, 1, 1, 1], [0], [0]>} : vector<2x8x32xf32>, vector<2x13x32xf32>, vector<2x8x13xf32> -> vector<2x8x13xf32>
    %3 = tpu.iota {dimensions = array<i32: 0>} : vector<8x13xi32>
    %4 = tpu.iota {dimensions = array<i32: 1>} : vector<8x13xi32>
    %c8_i32 = arith.constant 8 : i32
    %5 = vector.broadcast %c8_i32 : i32 to vector<8x13xi32>
    %6 = arith.cmpi slt, %4, %5 : vector<8x13xi32>
    %7 = arith.subi %3, %4 : vector<8x13xi32>
    %8 = math.absi %7 : vector<8x13xi32>
    %c5_i32 = arith.constant 5 : i32
    %9 = vector.broadcast %c5_i32 : i32 to vector<8x13xi32>
    %10 = arith.cmpi sle, %8, %9 : vector<8x13xi32>
    %c0_i32 = arith.constant 0 : i32
    %11 = vector.broadcast %c0_i32 : i32 to vector<8x13xi32>
    %12 = arith.cmpi sgt, %8, %11 : vector<8x13xi32>
    %13 = arith.andi %10, %12 : vector<8x13xi1>
    %cst_5 = arith.constant 7.812500e-03 : f32
    %cst_6 = arith.constant 0.000000e+00 : f32
    %14 = vector.broadcast %cst_5 : f32 to vector<8x13xf32>
    %15 = vector.broadcast %cst_6 : f32 to vector<8x13xf32>
    %16 = arith.select %13, %14, %15 : vector<8x13xi1>, vector<8x13xf32>
    %cst_7 = arith.constant 1.250000e-02 : f32
    %17 = vector.broadcast %cst_7 : f32 to vector<8x13xf32>
    %18 = arith.select %6, %16, %17 : vector<8x13xi1>, vector<8x13xf32>
    %cst_8 = arith.constant -1.000000e+00 : f32
    %cst_9 = arith.constant 1.000000e+00 : f32
    %19 = vector.broadcast %cst_8 : f32 to vector<8x13xf32>
    %20 = vector.broadcast %cst_9 : f32 to vector<8x13xf32>
    %21 = arith.select %6, %19, %20 : vector<8x13xi1>, vector<8x13xf32>
    %22 = vector.shape_cast %21 : vector<8x13xf32> to vector<1x8x13xf32>
    %23 = vector.broadcast %22 : vector<1x8x13xf32> to vector<2x8x13xf32>
    %24 = arith.mulf %23, %2 : vector<2x8x13xf32>
    %cst_10 = arith.constant 0.000000e+00 : f32
    %25 = vector.broadcast %cst_10 : f32 to vector<2x8x13xf32>
    %26 = arith.maximumf %25, %24 : vector<2x8x13xf32>
    %27 = vector.broadcast %cst_10 : f32 to vector<2x8x13xf32>
    %28 = arith.subf %27, %24 : vector<2x8x13xf32>
    %29 = arith.cmpf one, %28, %28 : vector<2x8x13xf32>
    %30 = vector.broadcast %cst_10 : f32 to vector<2x8x13xf32>
    %31 = arith.addf %30, %24 : vector<2x8x13xf32>
    %32 = math.absf %28 : vector<2x8x13xf32>
    %cst_11 = arith.constant 0.000000e+00 : f32
    %33 = vector.broadcast %cst_11 : f32 to vector<2x8x13xf32>
    %34 = arith.subf %33, %32 : vector<2x8x13xf32>
    %35 = math.exp %34 : vector<2x8x13xf32>
    %36 = math.log1p %35 : vector<2x8x13xf32>
    %37 = arith.addf %26, %36 : vector<2x8x13xf32>
    %38 = arith.select %29, %31, %37 : vector<2x8x13xi1>, vector<2x8x13xf32>
    %39 = vector.shape_cast %6 : vector<8x13xi1> to vector<1x8x13xi1>
    %cst_12 = arith.constant 1.000000e+02 : f32
    %40 = vector.broadcast %cst_12 : f32 to vector<2x8x13xf32>
    %41 = arith.minimumf %38, %40 : vector<2x8x13xf32>
    %42 = vector.shape_cast %39 : vector<1x8x13xi1> to vector<1x8x13xi1>
    %43 = vector.broadcast %42 : vector<1x8x13xi1> to vector<2x8x13xi1>
    %44 = arith.select %43, %41, %38 : vector<2x8x13xi1>, vector<2x8x13xf32>
    %45 = vector.shape_cast %18 : vector<8x13xf32> to vector<1x8x13xf32>
    %46 = vector.broadcast %45 : vector<1x8x13xf32> to vector<2x8x13xf32>
    %47 = arith.mulf %44, %46 : vector<2x8x13xf32>
    %cst_13 = arith.constant dense<0.000000e+00> : vector<8x13xf32>
    %48 = vector.multi_reduction <add>, %47, %cst_13 [0] : vector<2x8x13xf32> to vector<8x13xf32>
    %49 = vector.shape_cast %48 : vector<8x13xf32> to vector<1x8x13xf32>
    %cst_14 = arith.constant dense<0.000000e+00> : vector<1xf32>
    %50 = vector.multi_reduction <add>, %49, %cst_14 [1, 2] : vector<1x8x13xf32> to vector<1xf32>
    %51 = vector.shape_cast %50 : vector<1xf32> to vector<1x1x1xf32>
    %52 = vector.extract %51[0, 0, 0] : f32 from vector<1x1x1xf32>
    %53 = vector.broadcast %52 : f32 to vector<1x1xf32>
    %c0_15 = arith.constant 0 : index
    %c0_16 = arith.constant 0 : index
    %54 = vector.load %arg3[%c0_15, %c0_16] : memref<1x1xf32, #tpu.memory_space<vmem>>, vector<1x1xf32>
    tpu.vector_store %arg3[%c0_15, %c0_16], %53 {strides = array<i32>} : memref<1x1xf32, #tpu.memory_space<vmem>>, vector<1x1xf32>,
    return
  }
  func.func @transform_0(%arg0: i32) -> (i32, i32, i32) {
    %c0_i32 = arith.constant 0 : i32
    %c0_i32_0 = arith.constant 0 : i32
    %c0_i32_1 = arith.constant 0 : i32
    %c0_i32_2 = arith.constant 0 : i32
    return %c0_i32, %c0_i32_0, %c0_i32_1 : i32, i32, i32
  }
  func.func @transform_1(%arg0: i32) -> (i32, i32, i32) {
    %c0_i32 = arith.constant 0 : i32
    %c0_i32_0 = arith.constant 0 : i32
    %c0_i32_1 = arith.constant 0 : i32
    %c0_i32_2 = arith.constant 0 : i32
    return %c0_i32, %c0_i32_0, %c0_i32_1 : i32, i32, i32
  }
  func.func @transform_2(%arg0: i32) -> (i32, i32) {
    %c0_i32 = arith.constant 0 : i32
    %c0_i32_0 = arith.constant 0 : i32
    %c0_i32_1 = arith.constant 0 : i32
    return %c0_i32, %c0_i32_0 : i32, i32
  }
}

</mosaic_0001>

<llo_original>
// kernel: sgns_forward.1
$region0: #{sgns_forward.1}
  #allocation0 [shape = 'u32[]', space=smem, size = 0x4, offset = 0x4, fixed_abs, tag = 'smem constant byte address 0x4 - core index']
  #allocation1 [shape = 'u32[144,128]{1,0:T(1,128)}', space=vmem, size = 0x12000, scoped, tag = 'internal scratch']
  %s0 = inlined_call_operand.vmem [shape: f32[2,8,32], index: 0, kind: input, shape index: {}]
  %s1 = inlined_call_operand.vmem [shape: f32[2,13,32], index: 1, kind: input, shape index: {}]
  %s2 = inlined_call_operand.hbm [shape: f32[1,1], index: 2, kind: output, shape index: {}]
  %s3 = sld [smem:[#allocation0]]
  $region18: #{sgns_forward.1} parent=0
    _
  %s5 = ssub.s32 1, %s3
  %s6 = scalar_select 0, %s5, %s3
  $region1: #{sgns_forward.1} parent=0
    #allocation2 [shape = 'u8[512]{0}', space=vmem, size = 0x400, scoped, tag = 'output window, operand 0, single buffered']
    #allocation3 [shape = 's32[1]{0}', space=sflag, size = 0x4, scoped, tag = 'scoped memory for sgns_forward.1']
    %7 = vsyncpa [#allocation3], 0
    // Predicated region
    $region2: #{sgns_forward.1} parent=1 // pred_check
      _
    $region3: #{sgns_forward.1} parent=1 // pred_check_branch
      %9 = sbr.rel (0) target = $region5
    $region4: #{sgns_forward.1} parent=1 // pred_region
      _
    $region5: #{sgns_forward.1} parent=1 // pred_fallthru
      _
    // Predicated region
    $region6: #{sgns_forward.1} parent=1 // pred_check
      _
    $region7: #{sgns_forward.1} parent=1 // pred_check_branch
      %11 = sbr.rel (0) target = $region9
    $region8: #{sgns_forward.1} parent=1 // pred_region
      _
    $region9: #{sgns_forward.1} parent=1 // pred_fallthru
      _
    %v12 = vld [vmem:[%s0] sm:$0xff]
    %v13 = vld [vmem:[%s0 + $0x8] sm:$0xff]
    %v14 = vld [vmem:[%s1] sm:$0xff]
    %v15 = vld [vmem:[%s1 + $0x8] sm:$0x1f]
    %v16 = vld [vmem:[%s1 + $0x10] sm:$0xff]
    %v17 = vld [vmem:[%s1 + $0x18] sm:$0x1f]
    %vm18 = vcmask 261120
    %v20 = vsel %vm18, %v12, 0
    %v23 = vsel %vm18, %v14, 0
    %v26 = vsel %vm18, %v15, 0
    %28 = vmatprep.subr.mxu0 0.0
    %29 = vmatpush1.xpose.msra.mxu0 %v23
    %30 = vmatprep.subr.mxu0 0.0
    %31 = vmatpush1.xpose.msra.mxu0 %v26
    %32 = vmatprep.subr.mxu0 0.0
    %33 = vmatpush1.xpose.msra.mxu0 0.0
    %34 = vmatprep.subr.mxu0 0.0
    %35 = vmatpush1.xpose.msra.mxu0 0.0
    %36 = vmatprep.subr.mxu0 0.0
    %37 = vmatpush1.xpose.msra.mxu0 0.0
    %38 = vmatprep.subr.mxu0 0.0
    %39 = vmatpush1.xpose.msra.mxu0 0.0
    %40 = vmatprep.subr.mxu0 0.0
    %41 = vmatpush1.xpose.msra.mxu0 0.0
    %42 = vmatprep.subr.mxu0 0.0
    %43 = vmatpush1.xpose.msra.mxu0 0.0
    %44 = vmatprep.subr.mxu0 0.0
    %45 = vmatpush1.xpose.msra.mxu0 0.0
    %46 = vmatprep.subr.mxu0 0.0
    %47 = vmatpush1.xpose.msra.mxu0 0.0
    %48 = vmatprep.subr.mxu0 0.0
    %49 = vmatpush1.xpose.msra.mxu0 0.0
    %50 = vmatprep.subr.mxu0 0.0
    %51 = vmatpush1.xpose.msra.mxu0 0.0
    %52 = vmatprep.subr.mxu0 0.0
    %53 = vmatpush1.xpose.msra.mxu0 0.0
    %54 = vmatprep.subr.mxu0 0.0
    %55 = vmatpush1.xpose.msra.mxu0 0.0
    %56 = vmatprep.subr.mxu0 0.0
    %57 = vmatpush1.xpose.msra.mxu0 0.0
    %58 = vmatprep.subr.mxu0 0.0
    %59 = vmatpush1.xpose.msra.mxu0 0.0
    %60 = vmatprep.subr.mxu0 0.0
    %61 = vmatpush1.xpose.msra.mxu0 0.0
    %62 = vmatprep.subr.mxu0 0.0
    %63 = vmatpush1.xpose.msra.mxu0 0.0
    %64 = vmatprep.subr.mxu0 0.0
    %65 = vmatpush1.xpose.msra.mxu0 0.0
    %66 = vmatprep.subr.mxu0 0.0
    %67 = vmatpush1.xpose.msra.mxu0 0.0
    %68 = vmatprep.subr.mxu0 0.0
    %69 = vmatpush1.xpose.msra.mxu0 0.0
    %70 = vmatprep.subr.mxu0 0.0
    %71 = vmatpush1.xpose.msra.mxu0 0.0
    %72 = vmatprep.subr.mxu0 0.0
    %73 = vmatpush1.xpose.msra.mxu0 0.0
    %74 = vmatprep.subr.mxu0 0.0
    %75 = vmatpush1.xpose.msra.mxu0 0.0
    %76 = vmatprep.subr.mxu0 0.0
    %77 = vmatpush1.xpose.msra.mxu0 0.0
    %78 = vmatprep.subr.mxu0 0.0
    %79 = vmatpush1.xpose.msra.mxu0 0.0
    %80 = vmatprep.subr.mxu0 0.0
    %81 = vmatpush1.xpose.msra.mxu0 0.0
    %82 = vmatprep.subr.mxu0 0.0
    %83 = vmatpush1.xpose.msra.mxu0 0.0
    %84 = vmatprep.subr.mxu0 0.0
    %85 = vmatpush1.xpose.msra.mxu0 0.0
    %86 = vmatprep.subr.mxu0 0.0
    %87 = vmatpush1.xpose.msra.mxu0 0.0
    %88 = vmatprep.subr.mxu0 0.0
    %89 = vmatpush1.xpose.msra.mxu0 0.0
    %90 = vmatprep.subr.mxu0 0.0
    %91 = vmatpush1.xpose.msra.mxu0 0.0
    %92 = vmatprep.mubr.f32.mxu0 0.0
    %93 = vmatmul.mubr.f32.gmra.mrb[0].mxu0 %v20
    %v94 = vpop.f32.mrb[0].mxu0
    %v95 = vadd.f32 0.0, %v94
    %v96 = vpop.f32.mrb[0].mxu0
    %97 = vdwg.mxu0
    %v99 = vsel %vm18, %v13, 0
    %v102 = vsel %vm18, %v16, 0
    %v105 = vsel %vm18, %v17, 0
    %107 = vmatprep.subr.mxu0 0.0
    %108 = vmatpush1.xpose.msra.mxu0 %v102
    %109 = vmatprep.subr.mxu0 0.0
    %110 = vmatpush1.xpose.msra.mxu0 %v105
    %111 = vmatprep.subr.mxu0 0.0
    %112 = vmatpush1.xpose.msra.mxu0 0.0
    %113 = vmatprep.subr.mxu0 0.0
    %114 = vmatpush1.xpose.msra.mxu0 0.0
    %115 = vmatprep.subr.mxu0 0.0
    %116 = vmatpush1.xpose.msra.mxu0 0.0
    %117 = vmatprep.subr.mxu0 0.0
    %118 = vmatpush1.xpose.msra.mxu0 0.0
    %119 = vmatprep.subr.mxu0 0.0
    %120 = vmatpush1.xpose.msra.mxu0 0.0
    %121 = vmatprep.subr.mxu0 0.0
    %122 = vmatpush1.xpose.msra.mxu0 0.0
    %123 = vmatprep.subr.mxu0 0.0
    %124 = vmatpush1.xpose.msra.mxu0 0.0
    %125 = vmatprep.subr.mxu0 0.0
    %126 = vmatpush1.xpose.msra.mxu0 0.0
    %127 = vmatprep.subr.mxu0 0.0
    %128 = vmatpush1.xpose.msra.mxu0 0.0
    %129 = vmatprep.subr.mxu0 0.0
    %130 = vmatpush1.xpose.msra.mxu0 0.0
    %131 = vmatprep.subr.mxu0 0.0
    %132 = vmatpush1.xpose.msra.mxu0 0.0
    %133 = vmatprep.subr.mxu0 0.0
    %134 = vmatpush1.xpose.msra.mxu0 0.0
    %135 = vmatprep.subr.mxu0 0.0
    %136 = vmatpush1.xpose.msra.mxu0 0.0
    %137 = vmatprep.subr.mxu0 0.0
    %138 = vmatpush1.xpose.msra.mxu0 0.0
    %139 = vmatprep.subr.mxu0 0.0
    %140 = vmatpush1.xpose.msra.mxu0 0.0
    %141 = vmatprep.subr.mxu0 0.0
    %142 = vmatpush1.xpose.msra.mxu0 0.0
    %143 = vmatprep.subr.mxu0 0.0
    %144 = vmatpush1.xpose.msra.mxu0 0.0
    %145 = vmatprep.subr.mxu0 0.0
    %146 = vmatpush1.xpose.msra.mxu0 0.0
    %147 = vmatprep.subr.mxu0 0.0
    %148 = vmatpush1.xpose.msra.mxu0 0.0
    %149 = vmatprep.subr.mxu0 0.0
    %150 = vmatpush1.xpose.msra.mxu0 0.0
    %151 = vmatprep.subr.mxu0 0.0
    %152 = vmatpush1.xpose.msra.mxu0 0.0
    %153 = vmatprep.subr.mxu0 0.0
    %154 = vmatpush1.xpose.msra.mxu0 0.0
    %155 = vmatprep.subr.mxu0 0.0
    %156 = vmatpush1.xpose.msra.mxu0 0.0
    %157 = vmatprep.subr.mxu0 0.0
    %158 = vmatpush1.xpose.msra.mxu0 0.0
    %159 = vmatprep.subr.mxu0 0.0
    %160 = vmatpush1.xpose.msra.mxu0 0.0
    %161 = vmatprep.subr.mxu0 0.0
    %162 = vmatpush1.xpose.msra.mxu0 0.0
    %163 = vmatprep.subr.mxu0 0.0
    %164 = vmatpush1.xpose.msra.mxu0 0.0
    %165 = vmatprep.subr.mxu0 0.0
    %166 = vmatpush1.xpose.msra.mxu0 0.0
    %167 = vmatprep.subr.mxu0 0.0
    %168 = vmatpush1.xpose.msra.mxu0 0.0
    %169 = vmatprep.subr.mxu0 0.0
    %170 = vmatpush1.xpose.msra.mxu0 0.0
    %171 = vmatprep.mubr.f32.mxu0 0.0
    %172 = vmatmul.mubr.f32.gmra.mrb[0].mxu0 %v99
    %v173 = vpop.f32.mrb[0].mxu0
    %v174 = vadd.f32 0.0, %v173
    %v175 = vpop.f32.mrb[0].mxu0
    %176 = vdwg.mxu0
    %v177 = vlaneseq
    %v178 = vshrl.u32 %v177, 7
    %v179 = vlaneseq
    %v180 = vand.u32 %v179, 127
    %vm181 = vcmp.lt.s32.totalorder %v180, 8
    %v182 = vsub.s32 %v178, %v180
    %vm183 = vcmp.lt.s32.totalorder %v182, 0
    %v184 = vsub.s32 0, %v182
    %v185 = vsel %vm183, %v184, %v182
    %vm186 = vcmp.le.s32.totalorder %v185, 5
    %vm187 = vcmp.gt.s32.totalorder %v185, 0
    %vm188 = vmand %vm186, %vm187
    %v189 = vsel %vm188, 0.0078125, 0.0
    %v190 = vsel %vm181, %v189, 0.0125
    %v191 = vsel %vm181, -1.0, 1.0
    %v192 = vmul.f32 %v191, %v95
    %v193 = vmul.f32 %v191, %v174
    %v194 = vmax.f32 %v192, 0.0
    %v195 = vmax.f32 %v193, 0.0
    %v196 = vsub.f32 0.0, %v192
    %v197 = vsub.f32 0.0, %v193
    %vm198 = vcmp.ne.f32.partialorder %v196, %v196
    %vm199 = vcmp.ne.f32.partialorder %v197, %v197
    %v200 = vadd.f32 %v192, 0.0
    %v201 = vadd.f32 %v193, 0.0
    %v202 = vand.u32 2147483647, %v196
    %v203 = vand.u32 2147483647, %v197
    %v204 = vsub.f32 0.0, %v202
    %v205 = vsub.f32 0.0, %v203
    %v206 = vmul.f32 %v204, 1.442695
    %v207 = vpow.pop %v206
    %v208 = vmul.f32 %v205, 1.442695
    %v209 = vpow.pop %v208
    %v210 = vadd.f32 %v207, 1.0
    %v211 = vlog2.pop %v210
    %v212 = vmul.f32 %v211, 0.6931472
    %v213 = vmul.f32 -0.5, %v207
    %v214 = vadd.f32 %v213, 1.0
    %v215 = vmul.f32 %v214, %v207
    %v216 = vand.u32 2147483647, %v207
    %vm217 = vcmp.lt.f32.partialorder %v216, 0.0004427343
    %v218 = vsel %vm217, %v215, %v212
    %v219 = vadd.f32 %v209, 1.0
    %v220 = vlog2.pop %v219
    %v221 = vmul.f32 %v220, 0.6931472
    %v222 = vmul.f32 -0.5, %v209
    %v223 = vadd.f32 %v222, 1.0
    %v224 = vmul.f32 %v223, %v209
    %v225 = vand.u32 2147483647, %v209
    %vm226 = vcmp.lt.f32.partialorder %v225, 0.0004427343
    %v227 = vsel %vm226, %v224, %v221
    %v228 = vadd.f32 %v194, %v218
    %v229 = vadd.f32 %v195, %v227
    %v230 = vsel %vm198, %v200, %v228
    %v231 = vsel %vm199, %v201, %v229
    %v232 = vmin.f32 %v230, 100.0
    %v233 = vmin.f32 %v231, 100.0
    %v234 = vsel %vm181, 1, 0
    %vm235 = vcmp.eq.s32.totalorder %v234, 1
    %v236 = vsel %vm235, %v232, %v230
    %v237 = vsel %vm235, %v233, %v231
    %v238 = vmul.f32 %v236, %v190
    %v239 = vmul.f32 %v237, %v190
    %vm240 = vcmask 105472
    %v241 = vsel %vm240, %v238, 0.0
    %v242 = vsel %vm240, %v239, 0.0
    %v243 = vadd.f32 %v241, %v242
    %v244 = vsel %vm240, %v243, 0.0
    %245 = vadd.xlane.f32.xlu0 %v244
    %v246 = vpop.xlane.xlu0 %245
    %v247 = vrot.slane %v246, 4
    %v248 = vadd.f32 %v246, %v247
    %v249 = vrot.slane %v248, 2
    %v250 = vadd.f32 %v248, %v249
    %v251 = vrot.slane %v250, 1
    %v252 = vadd.f32 %v250, %v251
    %s253 = vtos %v252
    %v254 = vstv %s253
    %vm255 = vcmask 0
    %256 = vst.msk [vmem:[#allocation2] sm:$0x1] %vm255, %v254
    // Predicated region
    $region10: #{sgns_forward.1} parent=1 // pred_check
      _
    $region11: #{sgns_forward.1} parent=1 // pred_check_branch
      %258 = sbr.rel (0) target = $region13
    $region12: #{sgns_forward.1} parent=1 // pred_region
      %s260 = ssub.s32 16, 16
      %261 = vsyncadd [#allocation3], %s260
      %s263 = sshll.u32 [#allocation2], 4
      %s264 = int_to_ptr.vmem [resolvable:$true] %s263
      %266 = dma.vmem_to_hbm [thread:$0]  %s264, 16, %s2, [#allocation3]
    $region13: #{sgns_forward.1} parent=1 // pred_fallthru
      _
    // Predicated region
    $region14: #{sgns_forward.1} parent=1 // pred_check
      _
    $region15: #{sgns_forward.1} parent=1 // pred_check_branch
      %268 = sbr.rel (0) target = $region17
    $region16: #{sgns_forward.1} parent=1 // pred_region
      %269 = dma.done [#allocation3], 16
    $region17: #{sgns_forward.1} parent=1 // pred_fallthru
      _
    %270 = vsyncpa [#allocation3], 1

</llo_original>
